<compile_context>
chip_gen: v5e
topology: v5e:2x2
jax: 0.10.0
libtpu: 0.0.40
codegen_flags: <defaults>
</compile_context>

<pallas_src>
import functools

import jax
import jax.numpy as jnp
from jax import lax
from jax.experimental import pallas as pl
from jax.experimental.pallas import tpu as pltpu

_LANES = 128
_SUBLANES = 8
# (2048, 128) f32 tile = 1 MiB; 2 inputs x 2 pipeline buffers = 4 MiB VMEM
# (+ up to 2 MiB of output buffers on the 'none' path) -> comfortably under the
# scoped-VMEM defaults on v5e/v6e/v7x.
_MAX_TILE_ROWS = 2048


def _round_up(x, m):
    return (x + m - 1) // m * m


def _sublane_multiple(dtype):
    """Minimum sublane tiling for a dtype: f32 -> 8, bf16/f16 -> 16, 8-bit -> 32."""
    itemsize = jnp.dtype(dtype).itemsize
    return max(_SUBLANES, _SUBLANES * (4 // max(itemsize, 1)))


def _focal_elementwise(x, t, gamma, pos_weight):
    """Per-element focal loss in f32. Reuses a single exp(-|x|) for BCE + sigmoid."""
    neg_abs = -jnp.abs(x)
    e = jnp.exp(neg_abs)                                   # single EUP exp, reused
    softplus_negx = jnp.log1p(e) + jnp.maximum(-x, 0.0)    # log(1 + exp(-x)), stable
    if float(pos_weight) == 1.0:                           # pos_weight must be static
        bce = (1.0 - t) * x + softplus_negx
    else:
        log_weight = 1.0 + (jnp.float32(pos_weight) - 1.0) * t
        bce = (1.0 - t) * x + log_weight * softplus_negx
    inv_1pe = 1.0 / (1.0 + e)
    p = jnp.where(x >= 0.0, inv_1pe, e * inv_1pe)          # sigmoid(x), reuses e
    one_minus_pt = p + t - 2.0 * p * t                     # = 1 - (p*t + (1-p)*(1-t))
    if isinstance(gamma, int):
        focal_w = lax.integer_pow(one_minus_pt, gamma)     # gamma=2 -> w*w, no log/exp
    else:
        focal_w = one_minus_pt ** jnp.float32(gamma)
    return focal_w * bce


def _mask_tail(focal, tile_rows, last_valid):
    """Zero out elements at/after local flat index `last_valid` (static int)."""
    row_ids = lax.broadcasted_iota(jnp.int32, (tile_rows, _LANES), 0)
    lane_ids = lax.broadcasted_iota(jnp.int32, (tile_rows, _LANES), 1)
    lidx = row_ids * _LANES + lane_ids          # local index: fits int32 (<= 2048*128)
    return jnp.where(lidx < last_valid, focal, 0.0)


def _focal_partial_kernel(x_ref, t_ref, out_ref, *, gamma, pos_weight,
                          tile_rows, num_steps, last_valid):
    """Per-tile (8, 128) partial sums for reduction='mean'/'sum'.

    `last_valid` is None when every tile is entirely valid (no mask emitted);
    otherwise it is the static number of valid elements in the *last* tile.
    Only that boundary tile pays for the iota/compare/select mask.
    """
    x = x_ref[...].astype(jnp.float32)
    t = t_ref[...].astype(jnp.float32)
    focal = _focal_elementwise(x, t, gamma, pos_weight)

    def _reduce_write(f):
        # VPU-only partial reduce: (tile_rows, 128) -> (8, 128) via vreg adds.
        partial = jnp.sum(f.reshape(tile_rows // _SUBLANES, _SUBLANES, _LANES), axis=0)
        out_ref[...] = partial[None]

    if last_valid is None:                       # static: grid exactly covers n
        _reduce_write(focal)
    elif num_steps == 1:                         # static: the only tile is the boundary
        _reduce_write(_mask_tail(focal, tile_rows, last_valid))
    else:
        i = pl.program_id(0)

        @pl.when(i < num_steps - 1)              # interior tiles: no mask cost
        def _():
            _reduce_write(focal)

        @pl.when(i == num_steps - 1)             # single boundary tile: mask garbage
        def _():
            _reduce_write(_mask_tail(focal, tile_rows, last_valid))


def _focal_none_kernel(x_ref, t_ref, out_ref, *, gamma, pos_weight):
    """Elementwise output for reduction='none' (output in the input dtype)."""
    x = x_ref[...].astype(jnp.float32)
    t = t_ref[...].astype(jnp.float32)
    out_ref[...] = _focal_elementwise(x, t, gamma, pos_weight).astype(out_ref.dtype)


def focal_loss(inputs, targets, gamma=2, pos_weight=1, reduction='mean'):
    assert inputs.shape == targets.shape
    n = int(inputs.size)
    assert n > 0
    orig_shape = inputs.shape

    # Flatten to a lane-dense (rows, 128) slab in the native dtype.  The only
    # wrapper-side copy is a lane pad when n % 128 != 0 (corner case).
    x = inputs.reshape(-1)
    t = targets.reshape(-1)
    lane_pad = (-n) % _LANES
    if lane_pad:
        x = jnp.pad(x, (0, lane_pad))
        t = jnp.pad(t, (0, lane_pad))
    rows = (n + lane_pad) // _LANES
    x = x.reshape(rows, _LANES)
    t = t.reshape(rows, _LANES)

    # Row tile: multiple of the dtype sublane requirement, capped, and sized so
    # the grid has >= 2 steps whenever possible (v7x megacore).  The last block
    # may be partially out-of-bounds; the kernel masks invalid elements.
    sub_rows = max(_sublane_multiple(inputs.dtype), _sublane_multiple(targets.dtype))
    tile_rows = min(_MAX_TILE_ROWS, _round_up(pl.cdiv(rows, 2), sub_rows))
    num_steps = pl.cdiv(rows, tile_rows)
    covered = num_steps * tile_rows * _LANES
    last_valid = None if covered == n else n - (num_steps - 1) * tile_rows * _LANES

    in_spec = pl.BlockSpec((tile_rows, _LANES), lambda i: (i, 0))
    cparams = pltpu.CompilerParams(
        dimension_semantics=("parallel",))  # no cross-step dep -> megacore OK

    if reduction in ('mean', 'sum'):
        kernel = functools.partial(
            _focal_partial_kernel, gamma=gamma, pos_weight=pos_weight,
            tile_rows=tile_rows, num_steps=num_steps, last_valid=last_valid)
        partials = pl.pallas_call(
            kernel,
            out_shape=jax.ShapeDtypeStruct((num_steps, _SUBLANES, _LANES), jnp.float32),
            grid_spec=pltpu.PrefetchScalarGridSpec(
                num_scalar_prefetch=0,
                grid=(num_steps,),
                in_specs=[in_spec, in_spec],
                out_specs=pl.BlockSpec((1, _SUBLANES, _LANES), lambda i: (i, 0, 0)),
            ),
            compiler_params=cparams,
        )(x, t)
        total = jnp.sum(partials)  # tiny final reduce in XLA
        if reduction == 'mean':
            return total / jnp.float32(n)
        return total

    # reduction == 'none': elementwise output in the input dtype (PyTorch semantics).
    out_dtype = inputs.dtype if jnp.issubdtype(inputs.dtype, jnp.floating) else jnp.float32
    kernel = functools.partial(_focal_none_kernel, gamma=gamma, pos_weight=pos_weight)
    out = pl.pallas_call(
        kernel,
        out_shape=jax.ShapeDtypeStruct((rows, _LANES), out_dtype),
        grid_spec=pltpu.PrefetchScalarGridSpec(
            num_scalar_prefetch=0,
            grid=(num_steps,),
            in_specs=[in_spec, in_spec],
            out_specs=pl.BlockSpec((tile_rows, _LANES), lambda i: (i, 0)),
        ),
        compiler_params=cparams,
    )(x, t)
    if lane_pad:
        # Only when lane padding was added do we need the trailing slice.
        return out.reshape(-1)[:n].reshape(orig_shape)
    return out.reshape(orig_shape)


def focal_loss_ref(inputs, targets, gamma=2, pos_weight=1, reduction='mean'):
    x = inputs.astype(jnp.float32)
    t = targets.astype(jnp.float32)
    pw = jnp.float32(pos_weight)
    log_weight = 1.0 + (pw - 1.0) * t
    bce = (1.0 - t) * x + log_weight * (jnp.log1p(jnp.exp(-jnp.abs(x))) +
                                        jnp.maximum(-x, 0.0))
    p = jax.nn.sigmoid(x)
    pt = p * t + (1.0 - p) * (1.0 - t)
    focal = (1.0 - pt) ** gamma * bce
    if reduction == 'mean':
        return jnp.mean(focal)
    if reduction == 'sum':
        return jnp.sum(focal)
    return focal


if __name__ == "__main__":
    key = jax.random.PRNGKey(0)
    k1, k2, k3, k4 = jax.random.split(key, 4)

    # Lane-aligned NCHW-like shape: no padding, 2 grid steps, no mask anywhere.
    shape = (2, 4, 16, 16)
    logits = jax.random.normal(k1, shape, dtype=jnp.float32)
    targets = (jax.random.uniform(k2, shape) > 0.5).astype(jnp.float32)

    loss_mean = jax.block_until_ready(focal_loss(logits, targets))
    ref_mean = focal_loss_ref(logits, targets)
    assert jnp.allclose(loss_mean, ref_mean, rtol=1e-5, atol=1e-6), (loss_mean, ref_mean)

    loss_sum = jax.block_until_ready(focal_loss(logits, targets, reduction='sum'))
    ref_sum = focal_loss_ref(logits, targets, reduction='sum')
    assert jnp.allclose(loss_sum, ref_sum, rtol=1e-5, atol=1e-5), (loss_sum, ref_sum)

    loss_none = jax.block_until_ready(focal_loss(logits, targets, reduction='none'))
    ref_none = focal_loss_ref(logits, targets, reduction='none')
    assert loss_none.dtype == logits.dtype
    assert jnp.allclose(loss_none, ref_none, rtol=1e-5, atol=1e-6)

    # Non-lane-aligned shape: exercises the boundary-tile mask / partial block path.
    shape2 = (2, 3, 11, 13)
    logits2 = jax.random.normal(k3, shape2, dtype=jnp.float32)
    targets2 = (jax.random.uniform(k4, shape2) > 0.5).astype(jnp.float32)

    loss2 = jax.block_until_ready(
        focal_loss(logits2, targets2, gamma=2, pos_weight=3.0))
    ref2 = focal_loss_ref(logits2, targets2, gamma=2, pos_weight=3.0)
    assert jnp.allclose(loss2, ref2, rtol=1e-5, atol=1e-6), (loss2, ref2)

    loss2_none = jax.block_until_ready(focal_loss(logits2, targets2, reduction='none'))
    ref2_none = focal_loss_ref(logits2, targets2, reduction='none')
    assert loss2_none.shape == shape2
    assert jnp.allclose(loss2_none, ref2_none, rtol=1e-5, atol=1e-6)

    # bf16 inputs: 'none' output stays bf16 (halves writeback bytes vs f32).
    logits_bf = logits.astype(jnp.bfloat16)
    loss_bf = jax.block_until_ready(focal_loss(logits_bf, targets, reduction='none'))
    assert loss_bf.dtype == jnp.bfloat16
    ref_bf = focal_loss_ref(logits_bf, targets, reduction='none')
    assert jnp.allclose(loss_bf.astype(jnp.float32), ref_bf, rtol=2e-2, atol=2e-2)

    print("KERNEL_OK")
</pallas_src>

<mosaic_0001>
module attributes {stable_mosaic.version = 11 : i64} {
  func.func @_focal_partial_kernel(%arg0: i32, %arg1: memref<8x128xf32, #tpu.memory_space<vmem>>, %arg2: memref<8x128xf32, #tpu.memory_space<vmem>>, %arg3: memref<1x8x128xf32, #tpu.memory_space<vmem>>) attributes {dimension_semantics = [#tpu.dimension_semantics<parallel>], iteration_bounds = array<i64: 2>, scalar_prefetch = 0 : i64, scratch_operands = 0 : i64, tpu.core_type = #tpu.core_type<tc>, window_params = [{transform_indices = @transform_0, window_bounds = array<i64: 8, 128>}, {transform_indices = @transform_1, window_bounds = array<i64: 8, 128>}, {transform_indices = @transform_2, window_bounds = array<i64: 1, 8, 128>}]} {
    %c0 = arith.constant 0 : index
    %c0_0 = arith.constant 0 : index
    %0 = vector.load %arg1[%c0, %c0_0] : memref<8x128xf32, #tpu.memory_space<vmem>>, vector<8x128xf32>
    %c0_1 = arith.constant 0 : index
    %c0_2 = arith.constant 0 : index
    %1 = vector.load %arg2[%c0_1, %c0_2] : memref<8x128xf32, #tpu.memory_space<vmem>>, vector<8x128xf32>
    %2 = math.absf %0 : vector<8x128xf32>
    %cst = arith.constant 0.000000e+00 : f32
    %3 = vector.broadcast %cst : f32 to vector<8x128xf32>
    %4 = arith.subf %3, %2 : vector<8x128xf32>
    %5 = math.exp %4 : vector<8x128xf32>
    %6 = math.log1p %5 : vector<8x128xf32>
    %cst_3 = arith.constant 0.000000e+00 : f32
    %7 = vector.broadcast %cst_3 : f32 to vector<8x128xf32>
    %8 = arith.subf %7, %0 : vector<8x128xf32>
    %cst_4 = arith.constant 0.000000e+00 : f32
    %9 = vector.broadcast %cst_4 : f32 to vector<8x128xf32>
    %10 = arith.maximumf %8, %9 : vector<8x128xf32>
    %11 = arith.addf %6, %10 : vector<8x128xf32>
    %cst_5 = arith.constant 1.000000e+00 : f32
    %12 = vector.broadcast %cst_5 : f32 to vector<8x128xf32>
    %13 = arith.subf %12, %1 : vector<8x128xf32>
    %14 = arith.mulf %13, %0 : vector<8x128xf32>
    %15 = arith.addf %14, %11 : vector<8x128xf32>
    %cst_6 = arith.constant 1.000000e+00 : f32
    %16 = vector.broadcast %cst_6 : f32 to vector<8x128xf32>
    %17 = arith.addf %16, %5 : vector<8x128xf32>
    %cst_7 = arith.constant 1.000000e+00 : f32
    %18 = vector.broadcast %cst_7 : f32 to vector<8x128xf32>
    %19 = arith.divf %18, %17 : vector<8x128xf32>
    %cst_8 = arith.constant 0.000000e+00 : f32
    %20 = vector.broadcast %cst_8 : f32 to vector<8x128xf32>
    %21 = arith.cmpf oge, %0, %20 : vector<8x128xf32>
    %22 = arith.mulf %5, %19 : vector<8x128xf32>
    %23 = arith.select %21, %19, %22 : vector<8x128xi1>, vector<8x128xf32>
    %24 = arith.addf %23, %1 : vector<8x128xf32>
    %cst_9 = arith.constant 2.000000e+00 : f32
    %25 = vector.broadcast %cst_9 : f32 to vector<8x128xf32>
    %26 = arith.mulf %25, %23 : vector<8x128xf32>
    %27 = arith.mulf %26, %1 : vector<8x128xf32>
    %28 = arith.subf %24, %27 : vector<8x128xf32>
    %29 = arith.mulf %28, %28 : vector<8x128xf32>
    %30 = arith.mulf %29, %15 : vector<8x128xf32>
    %31 = vector.shape_cast %30 : vector<8x128xf32> to vector<1x8x128xf32>
    %cst_10 = arith.constant dense<0.000000e+00> : vector<8x128xf32>
    %32 = vector.multi_reduction <add>, %31, %cst_10 [0] : vector<1x8x128xf32> to vector<8x128xf32>
    %33 = vector.shape_cast %32 : vector<8x128xf32> to vector<1x8x128xf32>
    %c0_11 = arith.constant 0 : index
    %c0_12 = arith.constant 0 : index
    %c0_13 = arith.constant 0 : index
    %34 = vector.load %arg3[%c0_11, %c0_12, %c0_13] : memref<1x8x128xf32, #tpu.memory_space<vmem>>, vector<1x8x128xf32>
    tpu.vector_store %arg3[%c0_11, %c0_12, %c0_13], %33 {strides = array<i32>} : memref<1x8x128xf32, #tpu.memory_space<vmem>>, vector<1x8x128xf32>,
    return
  }
  func.func @transform_0(%arg0: i32) -> (i32, i32) {
    %c0_i32 = arith.constant 0 : i32
    %c0_i32_0 = arith.constant 0 : i32
    return %arg0, %c0_i32 : i32, i32
  }
  func.func @transform_1(%arg0: i32) -> (i32, i32) {
    %c0_i32 = arith.constant 0 : i32
    %c0_i32_0 = arith.constant 0 : i32
    return %arg0, %c0_i32 : i32, i32
  }
  func.func @transform_2(%arg0: i32) -> (i32, i32, i32) {
    %c0_i32 = arith.constant 0 : i32
    %c0_i32_0 = arith.constant 0 : i32
    %c0_i32_1 = arith.constant 0 : i32
    return %arg0, %c0_i32, %c0_i32_0 : i32, i32, i32
  }
}

</mosaic_0001>

<llo_original>
// kernel: tpu_custom_call.1
$region0: #{tpu_custom_call.1}
  #allocation0 [shape = 'u32[]', space=smem, size = 0x4, offset = 0x4, fixed_abs, tag = 'smem constant byte address 0x4 - core index']
  #allocation1 [shape = 'u32[72,128]{1,0:T(1,128)}', space=vmem, size = 0x9000, scoped, tag = 'internal scratch']
  %s0 = inlined_call_operand.hbm [shape: f32[16,128], index: 0, kind: input, shape index: {}]
  %s1 = inlined_call_operand.hbm [shape: f32[16,128], index: 1, kind: input, shape index: {}]
  %s2 = inlined_call_operand.hbm [shape: f32[2,8,128], index: 2, kind: output, shape index: {}]
  %s3 = sld [smem:[#allocation0]]
  $region49: #{tpu_custom_call.1} parent=0
    _
  %s5 = ssub.s32 1, %s3
  %s6 = scalar_select 0, %s5, %s3
  $region1: #{tpu_custom_call.1} parent=0
    #allocation2 [shape = 'u8[8192]{0}', space=vmem, size = 0x2000, scoped, tag = 'input window, operand 0']
    #allocation3 [shape = 's32[2]{0}', space=sflag, size = 0x8, scoped, tag = 'scoped memory for tpu_custom_call.1']
    #allocation4 [shape = 's32[2]{0}', space=sflag, size = 0x8, scoped, tag = 'scoped memory for tpu_custom_call.1']
    #allocation5 [shape = 'u8[8192]{0}', space=vmem, size = 0x2000, scoped, tag = 'input window, operand 1']
    #allocation6 [shape = 's32[2]{0}', space=sflag, size = 0x8, scoped, tag = 'scoped memory for tpu_custom_call.1']
    #allocation7 [shape = 'u8[8192]{0}', space=vmem, size = 0x2000, scoped, tag = 'output window, operand 0']
    %7 = vsyncpa [#allocation3], 0
    %s8 = scalar_lea.sflag [#allocation3], 1
    %9 = vsyncpa %s8, 0
    %10 = vsyncpa [#allocation6], 0
    %s11 = scalar_lea.sflag [#allocation6], 1
    %12 = vsyncpa %s11, 0
    %13 = vsyncpa [#allocation4], 0
    %s14 = scalar_lea.sflag [#allocation4], 1
    %15 = vsyncpa %s14, 0
    loop: start=0, step=1, limit=4
    $region2: #{tpu_custom_call.1} parent=1 // loop_pre_header
      _
    $region3: #{tpu_custom_call.1} parent=1 // loop_header
      %s17 = sphi 0, %s21
      %p18 = scmp.ge.s32.totalorder %s17, 4
      %s27 = sphi 0, %s29
      %s30 = sphi 0, %s27
      %s31 = sphi 0, %s30
      %s47 = sphi 0, %s31
      %s53 = sphi 0, %s55
      %s56 = sphi 0, %s53
      %s57 = sphi 0, %s56
      %s73 = sphi 0, %s57
      %s79 = sphi 0, %s81
      %s82 = sphi 0, %s79
      %s83 = sphi 0, %s82
      %s99 = sphi 0, %s83
    $region4: #{tpu_custom_call.1} parent=1 // loop_header_branch
      %20 = sbr.rel (%p18) target = $region8
    $region5: #{tpu_custom_call.1} parent=1 // loop_body
      %s22 = ssub.s32 %s17, 1
      %s23 = ssub.s32 %s17, 2
      %s24 = sadd.s32 %s17, 1
      %s25 = ssub.s32 %s17, %s24
      %p26 = scmp.eq.s32.totalorder %s25, 0
      %s28 = sadd.s32 %s27, 1
      %s29 = scalar_select %p26, %s27, %s28
      %p32 = pneg %p26
      %p33 = scmp.eq.s32.totalorder %s17, 1
      %p34 = por %p32, %p33
      %p35 = scmp.ne.s32.totalorder %s27, %s30
      %p36 = scmp.eq.s32.totalorder %s17, 0
      %p37 = por %p35, %p36
      %p38 = scmp.ne.s32.totalorder %s27, %s30
      %p39 = scmp.eq.s32.totalorder %s22, 1
      %p40 = por %p38, %p39
      %p41 = scmp.ne.s32.totalorder %s30, %s31
      %p42 = scmp.eq.s32.totalorder %s22, 0
      %p43 = por %p41, %p42
      %p44 = scmp.ne.s32.totalorder %s30, %s31
      %p45 = scmp.eq.s32.totalorder %s23, 1
      %p46 = por %p44, %p45
      %p48 = scmp.ne.s32.totalorder %s31, %s47
      %p49 = scmp.eq.s32.totalorder %s23, 0
      %p50 = por %p48, %p49
      %s51 = ssub.s32 %s17, %s24
      %p52 = scmp.eq.s32.totalorder %s51, 0
      %s54 = sadd.s32 %s53, 1
      %s55 = scalar_select %p52, %s53, %s54
      %p58 = pneg %p52
      %p59 = scmp.eq.s32.totalorder %s17, 1
      %p60 = por %p58, %p59
      %p61 = scmp.ne.s32.totalorder %s53, %s56
      %p62 = scmp.eq.s32.totalorder %s17, 0
      %p63 = por %p61, %p62
      %p64 = scmp.ne.s32.totalorder %s53, %s56
      %p65 = scmp.eq.s32.totalorder %s22, 1
      %p66 = por %p64, %p65
      %p67 = scmp.ne.s32.totalorder %s56, %s57
      %p68 = scmp.eq.s32.totalorder %s22, 0
      %p69 = por %p67, %p68
      %p70 = scmp.ne.s32.totalorder %s56, %s57
      %p71 = scmp.eq.s32.totalorder %s23, 1
      %p72 = por %p70, %p71
      %p74 = scmp.ne.s32.totalorder %s57, %s73
      %p75 = scmp.eq.s32.totalorder %s23, 0
      %p76 = por %p74, %p75
      %s77 = ssub.s32 %s17, %s24
      %p78 = scmp.eq.s32.totalorder %s77, 0
      %s80 = sadd.s32 %s79, 1
      %s81 = scalar_select %p78, %s79, %s80
      %p84 = pneg %p78
      %p85 = scmp.eq.s32.totalorder %s17, 1
      %p86 = por %p84, %p85
      %p87 = scmp.ne.s32.totalorder %s79, %s82
      %p88 = scmp.eq.s32.totalorder %s17, 0
      %p89 = por %p87, %p88
      %p90 = scmp.ne.s32.totalorder %s79, %s82
      %p91 = scmp.eq.s32.totalorder %s22, 1
      %p92 = por %p90, %p91
      %p93 = scmp.ne.s32.totalorder %s82, %s83
      %p94 = scmp.eq.s32.totalorder %s22, 0
      %p95 = por %p93, %p94
      %p96 = scmp.ne.s32.totalorder %s82, %s83
      %p97 = scmp.eq.s32.totalorder %s23, 1
      %p98 = por %p96, %p97
      %p100 = scmp.ne.s32.totalorder %s83, %s99
      %p101 = scmp.eq.s32.totalorder %s23, 0
      %p102 = por %p100, %p101
      %p103 = scmp.le.s32.totalorder 1, %s17
      %p104 = scmp.lt.s32.totalorder %s17, 3
      %p105 = pnand %p103, %p104
      %p106 = pneg %p105
      // Predicated region
      $region9: #{tpu_custom_call.1} parent=5 // pred_check
        _
      $region10: #{tpu_custom_call.1} parent=5 // pred_check_branch
        %108 = sbr.rel (%p105) target = $region12
      $region11: #{tpu_custom_call.1} parent=5 // pred_region
        %s109 = ssub.s32 %s17, 1
      $region12: #{tpu_custom_call.1} parent=5 // pred_fallthru
        _
      %p110 = scmp.lt.s32.totalorder %s17, 2
      // Predicated region
      $region13: #{tpu_custom_call.1} parent=5 // pred_check
        %p111 = pneg %p110
      $region14: #{tpu_custom_call.1} parent=5 // pred_check_branch
        %113 = sbr.rel (%p111) target = $region16
      $region15: #{tpu_custom_call.1} parent=5 // pred_region
        // Predicated region
        $region17: #{tpu_custom_call.1} parent=15 // pred_check
          %p114 = pneg %p37
        $region18: #{tpu_custom_call.1} parent=15 // pred_check_branch
          %116 = sbr.rel (%p114) target = $region20
        $region19: #{tpu_custom_call.1} parent=15 // pred_region
          %s117 = sand.u32 %s27, 1
          %s118 = scalar_lea.sflag [#allocation3], %s117
          %s119 = sand.u32 %s27, 1
          %s120 = smul.addr %s119, 8
          %s121 = scalar_lea.vmem [#allocation2], %s120
          %123 = vsyncadd %s118, 0
          %s124 = smul.addr %s17, 8
          %s125 = scalar_lea.hbm %s0, %s124
          %s127 = sshll.u32 %s125, 4
          %s128 = int_to_ptr.hbm [resolvable:$true] %s127
          %s129 = sshll.u32 %s121, 4
          %s130 = int_to_ptr.vmem [resolvable:$true] %s129
          %132 = dma.hbm_to_vmem [thread:$0]  %s128, 128, %s130, %s118
        $region20: #{tpu_custom_call.1} parent=15 // pred_fallthru
          _
        // Predicated region
        $region21: #{tpu_custom_call.1} parent=15 // pred_check
          %p133 = pneg %p63
        $region22: #{tpu_custom_call.1} parent=15 // pred_check_branch
          %135 = sbr.rel (%p133) target = $region24
        $region23: #{tpu_custom_call.1} parent=15 // pred_region
          %s136 = sand.u32 %s53, 1
          %s137 = scalar_lea.sflag [#allocation6], %s136
          %s138 = sand.u32 %s53, 1
          %s139 = smul.addr %s138, 8
          %s140 = scalar_lea.vmem [#allocation5], %s139
          %142 = vsyncadd %s137, 0
          %s143 = smul.addr %s17, 8
          %s144 = scalar_lea.hbm %s1, %s143
          %s146 = sshll.u32 %s144, 4
          %s147 = int_to_ptr.hbm [resolvable:$true] %s146
          %s148 = sshll.u32 %s140, 4
          %s149 = int_to_ptr.vmem [resolvable:$true] %s148
          %151 = dma.hbm_to_vmem [thread:$0]  %s147, 128, %s149, %s137
        $region24: #{tpu_custom_call.1} parent=15 // pred_fallthru
          _
      $region16: #{tpu_custom_call.1} parent=5 // pred_fallthru
        _
      %p152 = scmp.le.s32.totalorder 1, %s17
      %p153 = scmp.lt.s32.totalorder %s17, 3
      %p154 = pnand %p152, %p153
      %p155 = pneg %p154
      // Predicated region
      $region25: #{tpu_custom_call.1} parent=5 // pred_check
        _
      $region26: #{tpu_custom_call.1} parent=5 // pred_check_branch
        %157 = sbr.rel (%p154) target = $region28
      $region27: #{tpu_custom_call.1} parent=5 // pred_region
        %s158 = ssub.s32 %s17, 1
        %s159 = sand.u32 %s30, 1
        %s160 = scalar_lea.sflag [#allocation3], %s159
        %s161 = sand.u32 %s30, 1
        %s162 = smul.addr %s161, 8
        %s163 = scalar_lea.vmem [#allocation2], %s162
        // Predicated region
        $region29: #{tpu_custom_call.1} parent=27 // pred_check
          %p164 = pneg %p43
        $region30: #{tpu_custom_call.1} parent=27 // pred_check_branch
          %166 = sbr.rel (%p164) target = $region32
        $region31: #{tpu_custom_call.1} parent=27 // pred_region
          %168 = dma.done %s160, 128
        $region32: #{tpu_custom_call.1} parent=27 // pred_fallthru
          _
        %s169 = sand.u32 %s56, 1
        %s170 = scalar_lea.sflag [#allocation6], %s169
        %s171 = sand.u32 %s56, 1
        %s172 = smul.addr %s171, 8
        %s173 = scalar_lea.vmem [#allocation5], %s172
        // Predicated region
        $region33: #{tpu_custom_call.1} parent=27 // pred_check
          %p174 = pneg %p69
        $region34: #{tpu_custom_call.1} parent=27 // pred_check_branch
          %176 = sbr.rel (%p174) target = $region36
        $region35: #{tpu_custom_call.1} parent=27 // pred_region
          %178 = dma.done %s170, 128
        $region36: #{tpu_custom_call.1} parent=27 // pred_fallthru
          _
        %s179 = sand.u32 %s30, 1
        %s180 = scalar_lea.sflag [#allocation3], %s179
        %s181 = sand.u32 %s30, 1
        %s182 = smul.addr %s181, 8
        %s183 = scalar_lea.vmem [#allocation2], %s182
        %p184 = pneg %p43
        %p185 = pneg %p40
        %s186 = sand.u32 %s56, 1
        %s187 = scalar_lea.sflag [#allocation6], %s186
        %s188 = sand.u32 %s56, 1
        %s189 = smul.addr %s188, 8
        %s190 = scalar_lea.vmem [#allocation5], %s189
        %p191 = pneg %p69
        %p192 = pneg %p66
        %p193 = pneg %p95
        %p194 = pneg %p92
        %s195 = sand.u32 %s82, 1
        %s196 = scalar_lea.sflag [#allocation4], %s195
        %s197 = sand.u32 %s82, 1
        %s198 = smul.addr %s197, 8
        %s199 = scalar_lea.vmem [#allocation7], %s198
        %v200 = vld [vmem:[%s163] sm:$0xff]
        %v201 = vld [vmem:[%s173] sm:$0xff]
        %v202 = vand.u32 2147483647, %v200
        %v203 = vsub.f32 0.0, %v202
        %v204 = vmul.f32 %v203, 1.442695
        %v205 = vpow.pop %v204
        %v206 = vadd.f32 %v205, 1.0
        %v207 = vlog2.pop %v206
        %v208 = vmul.f32 %v207, 0.6931472
        %v209 = vmul.f32 -0.5, %v205
        %v210 = vadd.f32 %v209, 1.0
        %v211 = vmul.f32 %v210, %v205
        %v212 = vand.u32 2147483647, %v205
        %vm213 = vcmp.lt.f32.partialorder %v212, 0.0004427343
        %v214 = vsel %vm213, %v211, %v208
        %v215 = vsub.f32 0.0, %v200
        %v216 = vmax.f32 %v215, 0.0
        %v217 = vadd.f32 %v214, %v216
        %v218 = vsub.f32 1.0, %v201
        %v219 = vmul.f32 %v218, %v200
        %v220 = vadd.f32 %v219, %v217
        %v221 = vadd.f32 %v205, 1.0
        %v222 = vrcp.pop %v221
        %v223 = vmul.f32 %v221, %v222
        %v224 = vsub.f32 1.0, %v223
        %v225 = vmul.f32 %v222, %v224
        %v226 = vadd.f32 %v222, %v225
        %vm227 = vweird.f32 %v221
        %vm228 = vweird.f32 %v222
        %vm229 = vmor %vm227, %vm228
        %v230 = vsel %vm229, %v222, %v226
        %v231 = vand.u32 2147483647, %v221
        %vm232 = vcmp.eq.f32.partialorder %v231, 8.507059e+37
        %v233 = vand.u32 %v221, 2147483648
        %v234 = vor.u32 1.1754944e-38, %v233
        %v235 = vsel %vm232, %v234, %v230
        %v236 = vmul.f32 1.0, %v235
        %vm237 = vcmp.ge.f32.partialorder %v200, 0.0
        %v238 = vmul.f32 %v205, %v236
        %v239 = vsel %vm237, %v236, %v238
        %v240 = vadd.f32 %v239, %v201
        %v241 = vmul.f32 %v239, 2.0
        %v242 = vmul.f32 %v241, %v201
        %v243 = vsub.f32 %v240, %v242
        %v244 = vmul.f32 %v243, %v243
        %v245 = vmul.f32 %v244, %v220
        %v246 = vadd.f32 %v245, 0.0
        %247 = vst [vmem:[%s199] sm:$0xff] %v246
        %s248 = sand.u32 %s82, 1
        %s249 = scalar_lea.sflag [#allocation4], %s248
        %s250 = sand.u32 %s82, 1
        %s251 = smul.addr %s250, 8
        %s252 = scalar_lea.vmem [#allocation7], %s251
        // Predicated region
        $region37: #{tpu_custom_call.1} parent=27 // pred_check
          %p253 = pneg %p92
        $region38: #{tpu_custom_call.1} parent=27 // pred_check_branch
          %255 = sbr.rel (%p253) target = $region40
        $region39: #{tpu_custom_call.1} parent=27 // pred_region
          %257 = vsyncadd %s249, 0
          %s258 = smul.addr %s22, 8
          %s259 = scalar_lea.hbm %s2, %s258
          %s261 = sshll.u32 %s252, 4
          %s262 = int_to_ptr.vmem [resolvable:$true] %s261
          %s263 = sshll.u32 %s259, 4
          %s264 = int_to_ptr.hbm [resolvable:$true] %s263
          %266 = dma.vmem_to_hbm [thread:$0]  %s262, 128, %s264, %s249
        $region40: #{tpu_custom_call.1} parent=27 // pred_fallthru
          _
      $region28: #{tpu_custom_call.1} parent=5 // pred_fallthru
        _
      %p267 = scmp.le.s32.totalorder 2, %s17
      // Predicated region
      $region41: #{tpu_custom_call.1} parent=5 // pred_check
        %p268 = pneg %p267
      $region42: #{tpu_custom_call.1} parent=5 // pred_check_branch
        %270 = sbr.rel (%p268) target = $region44
      $region43: #{tpu_custom_call.1} parent=5 // pred_region
        %s271 = ssub.s32 %s17, 2
        // Predicated region
        $region45: #{tpu_custom_call.1} parent=43 // pred_check
          %p272 = pneg %p98
        $region46: #{tpu_custom_call.1} parent=43 // pred_check_branch
          %274 = sbr.rel (%p272) target = $region48
        $region47: #{tpu_custom_call.1} parent=43 // pred_region
          %s275 = sand.u32 %s83, 1
          %s276 = scalar_lea.sflag [#allocation4], %s275
          %s277 = sand.u32 %s83, 1
          %s278 = smul.addr %s277, 8
          %s279 = scalar_lea.vmem [#allocation7], %s278
          %281 = dma.done %s276, 128
        $region48: #{tpu_custom_call.1} parent=43 // pred_fallthru
          _
      $region44: #{tpu_custom_call.1} parent=5 // pred_fallthru
        _
    $region6: #{tpu_custom_call.1} parent=1 // loop_footer
      %s21 = sadd.s32 1, %s17
    $region7: #{tpu_custom_call.1} parent=1 // loop_footer_branch
      %16 = sbr.rel target = $region3
    $region8: #{tpu_custom_call.1} parent=1 // loop_exit
      _
    %282 = vsyncpa [#allocation3], 1
    %s283 = scalar_lea.sflag [#allocation3], 1
    %284 = vsyncpa %s283, 1
    %285 = vsyncpa [#allocation6], 1
    %s286 = scalar_lea.sflag [#allocation6], 1
    %287 = vsyncpa %s286, 1
    %288 = vsyncpa [#allocation4], 1
    %s289 = scalar_lea.sflag [#allocation4], 1
    %290 = vsyncpa %s289, 1

</llo_original>
